<compile_context>
chip_gen: v7x
topology: tpu7x:2x2x1
jax: 0.10.0
libtpu: 0.0.40
codegen_flags: <defaults>
</compile_context>

<pallas_src>
from functools import partial

import jax
import jax.numpy as jnp
from jax import lax
from jax.experimental import pallas as pl
from jax.experimental.pallas import tpu as pltpu


# Bias for padded logit lanes: exp() underflows to 0 in the softmax sum.
# -1e9 is safely representable in both f32 and bf16 (no inf/NaN risk).
NEG_LOGIT = -1e9


def _round_up(n, m):
    return ((n + m - 1) // m) * m


# ---------------------------------------------------------------------------
# Kernel: one invocation per batch tile; the full time loop runs in-body with
# the hidden state carried in registers.
# ---------------------------------------------------------------------------
def rnn_fused_kernel(x_ref,      # (T, TB, IP)   one-hot inputs + constant bias lane
                     h0_ref,     # (TB, H)       initial hidden (f32)
                     wh_ref,     # (IP + H, H)   stacked i2h weights (+ bias row)
                     wo_ref,     # (IP + H, OP)  stacked i2o weights (+ bias row, NEG_LOGIT pads)
                     out_ref,    # (TB, OP)      log-probs of the LAST step (f32)
                     h_out_ref): # (TB, H)       final hidden (f32)
    T = x_ref.shape[0]
    cdt = wh_ref.dtype          # MXU operand dtype (f32 or bf16)

    def step(t, h):
        # IP and H are both 128-lane aligned, so this concat is pure vreg
        # placement (no cross-lane shuffles).
        comb = jnp.concatenate([x_ref[t], h.astype(cdt)], axis=-1)
        return jnp.dot(comb, wh_ref[...], preferred_element_type=jnp.float32)

    # All but the last step: only the hidden recurrence is needed.
    h = lax.fori_loop(0, T - 1, step, h0_ref[...].astype(jnp.float32),
                      unroll=True)

    # Last step: hidden update + output projection + log-softmax.
    comb = jnp.concatenate([x_ref[T - 1], h.astype(cdt)], axis=-1)
    new_h = jnp.dot(comb, wh_ref[...], preferred_element_type=jnp.float32)
    logits = jnp.dot(comb, wo_ref[...], preferred_element_type=jnp.float32)

    m = jnp.max(logits, axis=-1, keepdims=True)
    shifted = logits - m
    lse = jnp.log(jnp.sum(jnp.exp(shifted), axis=-1, keepdims=True))
    out_ref[...] = (shifted - lse).astype(out_ref.dtype)
    h_out_ref[...] = new_h.astype(h_out_ref.dtype)


# ---------------------------------------------------------------------------
# One-time parameter preparation (hoisted out of the per-call path).
# ---------------------------------------------------------------------------
def prepare_params(w_i2h, b_i2h, w_i2o, b_i2o,
                   input_size, hidden_size, output_size,
                   dtype=jnp.float32):
    """Stack/transpose/pad the weights into MXU-friendly fused matrices.

    Layout of the combined activation (per row): [ x_pad (IP lanes) | h (H lanes) ]
    where x_pad column `input_size` carries a constant 1.0 (bias lane).

    dtype=jnp.bfloat16 is recommended on v6e/v7x (accumulation stays f32).
    """
    i_pad = _round_up(input_size + 1, 128)   # 57 (+1 bias lane) -> 128
    o_pad = _round_up(output_size, 128)      # 18 -> 128
    bias_col = input_size                    # lane holding constant 1.0
    k = i_pad + hidden_size

    wh = jnp.zeros((k, hidden_size), jnp.float32)
    wh = wh.at[:input_size, :].set(w_i2h[:, :input_size].T.astype(jnp.float32))
    wh = wh.at[bias_col, :].set(b_i2h.astype(jnp.float32))
    wh = wh.at[i_pad:, :].set(w_i2h[:, input_size:].T.astype(jnp.float32))

    wo = jnp.full((k, o_pad), 0.0, jnp.float32)
    wo = wo.at[:input_size, :output_size].set(
        w_i2o[:, :input_size].T.astype(jnp.float32))
    wo = wo.at[bias_col, :output_size].set(b_i2o.astype(jnp.float32))
    wo = wo.at[bias_col, output_size:].set(NEG_LOGIT)   # kill padded logit lanes
    wo = wo.at[i_pad:, :output_size].set(
        w_i2o[:, input_size:].T.astype(jnp.float32))

    return dict(wh=wh.astype(dtype), wo=wo.astype(dtype),
                input_size=input_size, hidden_size=hidden_size,
                output_size=output_size,
                i_pad=i_pad, o_pad=o_pad, bias_col=bias_col)


def encode_indices(idx, params):
    """Letter indices (T, B) -> one-hot inputs (T, B, i_pad) built directly at
    the padded width (no extra pad copy), with the constant bias lane set."""
    cdt = params["wh"].dtype
    x = jax.nn.one_hot(idx, params["i_pad"], dtype=cdt)
    return x.at[..., params["bias_col"]].set(jnp.asarray(1.0, cdt))


# ---------------------------------------------------------------------------
# Fused sequence forward: all T steps in a single pallas_call.
# Returns (log_probs_of_last_step (B, O), final_hidden (B, H)).
# ---------------------------------------------------------------------------
def rnn_forward_sequence(x_seq, h0, params, batch_tile=None):
    T, B = x_seq.shape[0], x_seq.shape[1]
    H = params["hidden_size"]
    O = params["output_size"]
    IP, OP = params["i_pad"], params["o_pad"]
    cdt = params["wh"].dtype

    if x_seq.shape[-1] != IP:
        # Generic path for raw (T, B, input_size) inputs: pad features and set
        # the bias lane.  Prefer encode_indices() to avoid this extra copy.
        pad = IP - x_seq.shape[-1]
        x_seq = jnp.pad(x_seq.astype(cdt), ((0, 0), (0, 0), (0, pad)))
        x_seq = x_seq.at[..., params["bias_col"]].set(jnp.asarray(1.0, cdt))
    else:
        x_seq = x_seq.astype(cdt)

    # Batch tiling: pad to the sublane multiple; tile only if requested (on
    # v7x a >=2-tile "parallel" batch axis fills both TensorCores).
    if batch_tile is None:
        tb = _round_up(B, 8)
    else:
        tb = _round_up(min(batch_tile, B), 8)
    b_pad = _round_up(B, tb)
    if b_pad != B:
        x_seq = jnp.pad(x_seq, ((0, 0), (0, b_pad - B), (0, 0)))
        h0 = jnp.pad(h0, ((0, b_pad - B), (0, 0)))
    h0 = h0.astype(jnp.float32)
    nb = b_pad // tb

    out_pad, h_final = pl.pallas_call(
        rnn_fused_kernel,
        out_shape=(
            jax.ShapeDtypeStruct((b_pad, OP), jnp.float32),
            jax.ShapeDtypeStruct((b_pad, H), jnp.float32),
        ),
        grid_spec=pltpu.PrefetchScalarGridSpec(
            num_scalar_prefetch=0,
            grid=(nb,),
            in_specs=[
                pl.BlockSpec((T, tb, IP), lambda b: (0, b, 0)),   # batch-tiled inputs
                pl.BlockSpec((tb, H), lambda b: (b, 0)),          # initial hidden
                pl.BlockSpec((IP + H, H), lambda b: (0, 0)),      # resident weights
                pl.BlockSpec((IP + H, OP), lambda b: (0, 0)),
            ],
            out_specs=(
                pl.BlockSpec((tb, OP), lambda b: (b, 0)),
                pl.BlockSpec((tb, H), lambda b: (b, 0)),
            ),
        ),
        compiler_params=pltpu.CompilerParams(
            # Batch tiles are independent -> megacore-shardable.
            dimension_semantics=("parallel",)),
    )(x_seq, h0, params["wh"], params["wo"])

    return out_pad[:B, :O], h_final[:B]


def rnn_forward(x, hidden, params):
    """Single RNN step (matches the PyTorch module's forward exactly)."""
    return rnn_forward_sequence(x[None], hidden, params)


def init_params(key, input_size, hidden_size, output_size):
    """nn.Linear-style init: U(-1/sqrt(fan_in), 1/sqrt(fan_in))."""
    k1, k2, k3, k4 = jax.random.split(key, 4)
    fan_in = input_size + hidden_size
    bound = 1.0 / jnp.sqrt(jnp.float32(fan_in))
    w_i2h = jax.random.uniform(k1, (hidden_size, fan_in), jnp.float32, -bound, bound)
    b_i2h = jax.random.uniform(k2, (hidden_size,), jnp.float32, -bound, bound)
    w_i2o = jax.random.uniform(k3, (output_size, fan_in), jnp.float32, -bound, bound)
    b_i2o = jax.random.uniform(k4, (output_size,), jnp.float32, -bound, bound)
    return w_i2h, b_i2h, w_i2o, b_i2o


if __name__ == "__main__":
    import string

    all_letters = string.ascii_letters + " .,;'"
    n_letters = len(all_letters)          # 57
    n_hidden = 128
    n_categories = 18                     # char-RNN name-classification task
    batch = 8                             # fills f32 sublanes
    seq_len = 8                           # e.g. 8-character names

    key = jax.random.PRNGKey(0)
    kparams, kidx = jax.random.split(key)
    w_i2h, b_i2h, w_i2o, b_i2o = init_params(kparams, n_letters, n_hidden, n_categories)
    params = prepare_params(w_i2h, b_i2h, w_i2o, b_i2o,
                            n_letters, n_hidden, n_categories)

    # Random letter indices -> padded one-hot sequence (T, B, i_pad), like
    # stacking lineToTensor(...) rows for a batch of names.
    idx = jax.random.randint(kidx, (seq_len, batch), 0, n_letters)
    x_seq = encode_indices(idx, params)
    hidden0 = jnp.zeros((batch, n_hidden), jnp.float32)

    out, h_final = rnn_forward_sequence(x_seq, hidden0, params)
    jax.block_until_ready((out, h_final))

    # ---- Reference: plain-JAX loop of the original per-step forward. ----
    x_raw = jax.nn.one_hot(idx, n_letters, dtype=jnp.float32)   # (T, B, 57)
    h = hidden0
    logits = None
    for t in range(seq_len):
        combined = jnp.concatenate([x_raw[t], h], axis=1)
        new_h = combined @ w_i2h.T + b_i2h
        logits = combined @ w_i2o.T + b_i2o
        h = new_h
    ref_out = jax.nn.log_softmax(logits, axis=1)

    assert out.shape == (batch, n_categories)
    assert h_final.shape == (batch, n_hidden)
    # Default TPU matmul precision differs slightly between groupings -> 5e-3.
    assert jnp.allclose(out, ref_out, atol=5e-3), "log-softmax output mismatch"
    assert jnp.allclose(h_final, h, atol=5e-3), "final hidden mismatch"

    # ---- Single-step path (T == 1) matches the module forward directly. ----
    out1, h1 = rnn_forward(x_seq[0], hidden0, params)
    combined = jnp.concatenate([x_raw[0], hidden0], axis=1)
    ref_out1 = jax.nn.log_softmax(combined @ w_i2o.T + b_i2o, axis=1)
    ref_h1 = combined @ w_i2h.T + b_i2h
    assert jnp.allclose(out1, ref_out1, atol=5e-3), "single-step output mismatch"
    assert jnp.allclose(h1, ref_h1, atol=5e-3), "single-step hidden mismatch"

    print("KERNEL_OK")
</pallas_src>

<mosaic_0001>
module attributes {stable_mosaic.version = 11 : i64} {
  func.func @rnn_fused_kernel(%arg0: i32, %arg1: memref<8x8x128xf32, #tpu.memory_space<vmem>>, %arg2: memref<8x128xf32, #tpu.memory_space<vmem>>, %arg3: memref<256x128xf32, #tpu.memory_space<vmem>>, %arg4: memref<256x128xf32, #tpu.memory_space<vmem>>, %arg5: memref<8x128xf32, #tpu.memory_space<vmem>>, %arg6: memref<8x128xf32, #tpu.memory_space<vmem>>) attributes {dimension_semantics = [#tpu.dimension_semantics<parallel>], iteration_bounds = array<i64: 1>, scalar_prefetch = 0 : i64, scratch_operands = 0 : i64, tpu.core_type = #tpu.core_type<tc>, window_params = [{transform_indices = @transform_0, window_bounds = array<i64: 8, 8, 128>}, {transform_indices = @transform_1, window_bounds = array<i64: 8, 128>}, {pipeline_mode = #tpu.pipeline_mode<synchronous>, transform_indices = @transform_2, window_bounds = array<i64: 256, 128>}, {pipeline_mode = #tpu.pipeline_mode<synchronous>, transform_indices = @transform_3, window_bounds = array<i64: 256, 128>}, {transform_indices = @transform_4, window_bounds = array<i64: 8, 128>}, {transform_indices = @transform_5, window_bounds = array<i64: 8, 128>}]} {
    %c0 = arith.constant 0 : index
    %c0_0 = arith.constant 0 : index
    %0 = vector.load %arg2[%c0, %c0_0] : memref<8x128xf32, #tpu.memory_space<vmem>>, vector<8x128xf32>
    %c0_i32 = arith.constant 0 : i32
    %1 = arith.index_cast %c0_i32 : i32 to index
    %c0_1 = arith.constant 0 : index
    %c0_2 = arith.constant 0 : index
    %2 = vector.load %arg1[%1, %c0_1, %c0_2] : memref<8x8x128xf32, #tpu.memory_space<vmem>>, vector<1x8x128xf32>
    %3 = vector.shape_cast %2 : vector<1x8x128xf32> to vector<8x128xf32>
    %4 = tpu.concatenate %3, %0 in 1 : vector<8x128xf32>, vector<8x128xf32> -> vector<8x256xf32>
    %c0_3 = arith.constant 0 : index
    %c0_4 = arith.constant 0 : index
    %5 = vector.load %arg3[%c0_3, %c0_4] : memref<256x128xf32, #tpu.memory_space<vmem>>, vector<256x128xf32>
    %cst = arith.constant dense<0.000000e+00> : vector<8x128xf32>
    %6 = tpu.matmul %4, %5, %cst {dimension_numbers = #tpu.dot_dimension_numbers<[1], [0], [0], [1], [0, 0, 1, 1], [], []>} : vector<8x256xf32>, vector<256x128xf32>, vector<8x128xf32> -> vector<8x128xf32>
    %c1_i32 = arith.constant 1 : i32
    %7 = arith.index_cast %c1_i32 : i32 to index
    %c0_5 = arith.constant 0 : index
    %c0_6 = arith.constant 0 : index
    %8 = vector.load %arg1[%7, %c0_5, %c0_6] : memref<8x8x128xf32, #tpu.memory_space<vmem>>, vector<1x8x128xf32>
    %9 = vector.shape_cast %8 : vector<1x8x128xf32> to vector<8x128xf32>
    %10 = tpu.concatenate %9, %6 in 1 : vector<8x128xf32>, vector<8x128xf32> -> vector<8x256xf32>
    %c0_7 = arith.constant 0 : index
    %c0_8 = arith.constant 0 : index
    %11 = vector.load %arg3[%c0_7, %c0_8] : memref<256x128xf32, #tpu.memory_space<vmem>>, vector<256x128xf32>
    %cst_9 = arith.constant dense<0.000000e+00> : vector<8x128xf32>
    %12 = tpu.matmul %10, %11, %cst_9 {dimension_numbers = #tpu.dot_dimension_numbers<[1], [0], [0], [1], [0, 0, 1, 1], [], []>} : vector<8x256xf32>, vector<256x128xf32>, vector<8x128xf32> -> vector<8x128xf32>
    %c2_i32 = arith.constant 2 : i32
    %13 = arith.index_cast %c2_i32 : i32 to index
    %c0_10 = arith.constant 0 : index
    %c0_11 = arith.constant 0 : index
    %14 = vector.load %arg1[%13, %c0_10, %c0_11] : memref<8x8x128xf32, #tpu.memory_space<vmem>>, vector<1x8x128xf32>
    %15 = vector.shape_cast %14 : vector<1x8x128xf32> to vector<8x128xf32>
    %16 = tpu.concatenate %15, %12 in 1 : vector<8x128xf32>, vector<8x128xf32> -> vector<8x256xf32>
    %c0_12 = arith.constant 0 : index
    %c0_13 = arith.constant 0 : index
    %17 = vector.load %arg3[%c0_12, %c0_13] : memref<256x128xf32, #tpu.memory_space<vmem>>, vector<256x128xf32>
    %cst_14 = arith.constant dense<0.000000e+00> : vector<8x128xf32>
    %18 = tpu.matmul %16, %17, %cst_14 {dimension_numbers = #tpu.dot_dimension_numbers<[1], [0], [0], [1], [0, 0, 1, 1], [], []>} : vector<8x256xf32>, vector<256x128xf32>, vector<8x128xf32> -> vector<8x128xf32>
    %c3_i32 = arith.constant 3 : i32
    %19 = arith.index_cast %c3_i32 : i32 to index
    %c0_15 = arith.constant 0 : index
    %c0_16 = arith.constant 0 : index
    %20 = vector.load %arg1[%19, %c0_15, %c0_16] : memref<8x8x128xf32, #tpu.memory_space<vmem>>, vector<1x8x128xf32>
    %21 = vector.shape_cast %20 : vector<1x8x128xf32> to vector<8x128xf32>
    %22 = tpu.concatenate %21, %18 in 1 : vector<8x128xf32>, vector<8x128xf32> -> vector<8x256xf32>
    %c0_17 = arith.constant 0 : index
    %c0_18 = arith.constant 0 : index
    %23 = vector.load %arg3[%c0_17, %c0_18] : memref<256x128xf32, #tpu.memory_space<vmem>>, vector<256x128xf32>
    %cst_19 = arith.constant dense<0.000000e+00> : vector<8x128xf32>
    %24 = tpu.matmul %22, %23, %cst_19 {dimension_numbers = #tpu.dot_dimension_numbers<[1], [0], [0], [1], [0, 0, 1, 1], [], []>} : vector<8x256xf32>, vector<256x128xf32>, vector<8x128xf32> -> vector<8x128xf32>
    %c4_i32 = arith.constant 4 : i32
    %25 = arith.index_cast %c4_i32 : i32 to index
    %c0_20 = arith.constant 0 : index
    %c0_21 = arith.constant 0 : index
    %26 = vector.load %arg1[%25, %c0_20, %c0_21] : memref<8x8x128xf32, #tpu.memory_space<vmem>>, vector<1x8x128xf32>
    %27 = vector.shape_cast %26 : vector<1x8x128xf32> to vector<8x128xf32>
    %28 = tpu.concatenate %27, %24 in 1 : vector<8x128xf32>, vector<8x128xf32> -> vector<8x256xf32>
    %c0_22 = arith.constant 0 : index
    %c0_23 = arith.constant 0 : index
    %29 = vector.load %arg3[%c0_22, %c0_23] : memref<256x128xf32, #tpu.memory_space<vmem>>, vector<256x128xf32>
    %cst_24 = arith.constant dense<0.000000e+00> : vector<8x128xf32>
    %30 = tpu.matmul %28, %29, %cst_24 {dimension_numbers = #tpu.dot_dimension_numbers<[1], [0], [0], [1], [0, 0, 1, 1], [], []>} : vector<8x256xf32>, vector<256x128xf32>, vector<8x128xf32> -> vector<8x128xf32>
    %c5_i32 = arith.constant 5 : i32
    %31 = arith.index_cast %c5_i32 : i32 to index
    %c0_25 = arith.constant 0 : index
    %c0_26 = arith.constant 0 : index
    %32 = vector.load %arg1[%31, %c0_25, %c0_26] : memref<8x8x128xf32, #tpu.memory_space<vmem>>, vector<1x8x128xf32>
    %33 = vector.shape_cast %32 : vector<1x8x128xf32> to vector<8x128xf32>
    %34 = tpu.concatenate %33, %30 in 1 : vector<8x128xf32>, vector<8x128xf32> -> vector<8x256xf32>
    %c0_27 = arith.constant 0 : index
    %c0_28 = arith.constant 0 : index
    %35 = vector.load %arg3[%c0_27, %c0_28] : memref<256x128xf32, #tpu.memory_space<vmem>>, vector<256x128xf32>
    %cst_29 = arith.constant dense<0.000000e+00> : vector<8x128xf32>
    %36 = tpu.matmul %34, %35, %cst_29 {dimension_numbers = #tpu.dot_dimension_numbers<[1], [0], [0], [1], [0, 0, 1, 1], [], []>} : vector<8x256xf32>, vector<256x128xf32>, vector<8x128xf32> -> vector<8x128xf32>
    %c6_i32 = arith.constant 6 : i32
    %37 = arith.index_cast %c6_i32 : i32 to index
    %c0_30 = arith.constant 0 : index
    %c0_31 = arith.constant 0 : index
    %38 = vector.load %arg1[%37, %c0_30, %c0_31] : memref<8x8x128xf32, #tpu.memory_space<vmem>>, vector<1x8x128xf32>
    %39 = vector.shape_cast %38 : vector<1x8x128xf32> to vector<8x128xf32>
    %40 = tpu.concatenate %39, %36 in 1 : vector<8x128xf32>, vector<8x128xf32> -> vector<8x256xf32>
    %c0_32 = arith.constant 0 : index
    %c0_33 = arith.constant 0 : index
    %41 = vector.load %arg3[%c0_32, %c0_33] : memref<256x128xf32, #tpu.memory_space<vmem>>, vector<256x128xf32>
    %cst_34 = arith.constant dense<0.000000e+00> : vector<8x128xf32>
    %42 = tpu.matmul %40, %41, %cst_34 {dimension_numbers = #tpu.dot_dimension_numbers<[1], [0], [0], [1], [0, 0, 1, 1], [], []>} : vector<8x256xf32>, vector<256x128xf32>, vector<8x128xf32> -> vector<8x128xf32>
    %c7_i32 = arith.constant 7 : i32
    %c7 = arith.constant 7 : index
    %c0_35 = arith.constant 0 : index
    %c0_36 = arith.constant 0 : index
    %43 = vector.load %arg1[%c7, %c0_35, %c0_36] : memref<8x8x128xf32, #tpu.memory_space<vmem>>, vector<1x8x128xf32>
    %44 = vector.shape_cast %43 : vector<1x8x128xf32> to vector<8x128xf32>
    %45 = tpu.concatenate %44, %42 in 1 : vector<8x128xf32>, vector<8x128xf32> -> vector<8x256xf32>
    %c0_37 = arith.constant 0 : index
    %c0_38 = arith.constant 0 : index
    %46 = vector.load %arg3[%c0_37, %c0_38] : memref<256x128xf32, #tpu.memory_space<vmem>>, vector<256x128xf32>
    %cst_39 = arith.constant dense<0.000000e+00> : vector<8x128xf32>
    %47 = tpu.matmul %45, %46, %cst_39 {dimension_numbers = #tpu.dot_dimension_numbers<[1], [0], [0], [1], [0, 0, 1, 1], [], []>} : vector<8x256xf32>, vector<256x128xf32>, vector<8x128xf32> -> vector<8x128xf32>
    %c0_40 = arith.constant 0 : index
    %c0_41 = arith.constant 0 : index
    %48 = vector.load %arg4[%c0_40, %c0_41] : memref<256x128xf32, #tpu.memory_space<vmem>>, vector<256x128xf32>
    %cst_42 = arith.constant dense<0.000000e+00> : vector<8x128xf32>
    %49 = tpu.matmul %45, %48, %cst_42 {dimension_numbers = #tpu.dot_dimension_numbers<[1], [0], [0], [1], [0, 0, 1, 1], [], []>} : vector<8x256xf32>, vector<256x128xf32>, vector<8x128xf32> -> vector<8x128xf32>
    %cst_43 = arith.constant dense<0xFF800000> : vector<8xf32>
    %50 = vector.multi_reduction <maximumf>, %49, %cst_43 [1] : vector<8x128xf32> to vector<8xf32>
    %51 = vector.shape_cast %50 : vector<8xf32> to vector<8x1xf32>
    %52 = vector.broadcast %51 : vector<8x1xf32> to vector<8x128xf32>
    %53 = arith.subf %49, %52 : vector<8x128xf32>
    %54 = math.exp %53 : vector<8x128xf32>
    %cst_44 = arith.constant dense<0.000000e+00> : vector<8xf32>
    %55 = vector.multi_reduction <add>, %54, %cst_44 [1] : vector<8x128xf32> to vector<8xf32>
    %56 = vector.shape_cast %55 : vector<8xf32> to vector<8x1xf32>
    %57 = math.log %56 : vector<8x1xf32>
    %58 = vector.broadcast %57 : vector<8x1xf32> to vector<8x128xf32>
    %59 = arith.subf %53, %58 : vector<8x128xf32>
    %c0_45 = arith.constant 0 : index
    %c0_46 = arith.constant 0 : index
    %60 = vector.load %arg5[%c0_45, %c0_46] : memref<8x128xf32, #tpu.memory_space<vmem>>, vector<8x128xf32>
    tpu.vector_store %arg5[%c0_45, %c0_46], %59 {strides = array<i32>} : memref<8x128xf32, #tpu.memory_space<vmem>>, vector<8x128xf32>,
    %c0_47 = arith.constant 0 : index
    %c0_48 = arith.constant 0 : index
    %61 = vector.load %arg6[%c0_47, %c0_48] : memref<8x128xf32, #tpu.memory_space<vmem>>, vector<8x128xf32>
    tpu.vector_store %arg6[%c0_47, %c0_48], %47 {strides = array<i32>} : memref<8x128xf32, #tpu.memory_space<vmem>>, vector<8x128xf32>,
    return
  }
  func.func @transform_0(%arg0: i32) -> (i32, i32, i32) {
    %c0_i32 = arith.constant 0 : i32
    %c0_i32_0 = arith.constant 0 : i32
    %c0_i32_1 = arith.constant 0 : i32
    return %c0_i32, %arg0, %c0_i32_0 : i32, i32, i32
  }
  func.func @transform_1(%arg0: i32) -> (i32, i32) {
    %c0_i32 = arith.constant 0 : i32
    %c0_i32_0 = arith.constant 0 : i32
    return %arg0, %c0_i32 : i32, i32
  }
  func.func @transform_2(%arg0: i32) -> (i32, i32) {
    %c0_i32 = arith.constant 0 : i32
    %c0_i32_0 = arith.constant 0 : i32
    %c0_i32_1 = arith.constant 0 : i32
    return %c0_i32, %c0_i32_0 : i32, i32
  }
  func.func @transform_3(%arg0: i32) -> (i32, i32) {
    %c0_i32 = arith.constant 0 : i32
    %c0_i32_0 = arith.constant 0 : i32
    %c0_i32_1 = arith.constant 0 : i32
    return %c0_i32, %c0_i32_0 : i32, i32
  }
  func.func @transform_4(%arg0: i32) -> (i32, i32) {
    %c0_i32 = arith.constant 0 : i32
    %c0_i32_0 = arith.constant 0 : i32
    return %arg0, %c0_i32 : i32, i32
  }
  func.func @transform_5(%arg0: i32) -> (i32, i32) {
    %c0_i32 = arith.constant 0 : i32
    %c0_i32_0 = arith.constant 0 : i32
    return %arg0, %c0_i32 : i32, i32
  }
}

</mosaic_0001>

<llo_original>
// kernel: tpu_custom_call.1
$region0: #{tpu_custom_call.1}
  #allocation0 [shape = 'u32[]', space=smem, size = 0x4, offset = 0x4, fixed_abs, tag = 'smem constant byte address 0x4 - core index']
  #allocation1 [shape = 'u32[144,128]{1,0:T(1,128)}', space=vmem, size = 0x12000, scoped, tag = 'internal scratch']
  %s0 = inlined_call_operand.hbm [shape: f32[8,8,128], index: 0, kind: input, shape index: {}]
  %s1 = inlined_call_operand.hbm [shape: f32[8,128], index: 1, kind: input, shape index: {}]
  %s2 = inlined_call_operand.hbm [shape: f32[256,128], index: 2, kind: input, shape index: {}]
  %s3 = inlined_call_operand.hbm [shape: f32[256,128], index: 3, kind: input, shape index: {}]
  %s4 = inlined_call_operand.hbm [shape: f32[8,128], index: 4, kind: output, shape index: {0}]
  %s5 = inlined_call_operand.hbm [shape: f32[8,128], index: 5, kind: output, shape index: {1}]
  %6 = xla_tuple %s4, %s5
  %s7 = sld [smem:[#allocation0]]
  $region50: #{tpu_custom_call.1} parent=0
    _
  %s9 = ssub.s32 1, %s7
  %s10 = scalar_select 0, %s9, %s7
  $region1: #{tpu_custom_call.1} parent=0
    #allocation2 [shape = 'u8[32768]{0}', space=vmem, size = 0x8000, scoped, tag = 'input window, operand 0, single buffered']
    #allocation3 [shape = 's32[1]{0}', space=sflag, size = 0x4, scoped, tag = 'scoped memory for tpu_custom_call.1']
    #allocation4 [shape = 's32[1]{0}', space=sflag, size = 0x4, scoped, tag = 'scoped memory for tpu_custom_call.1']
    #allocation5 [shape = 'u8[4096]{0}', space=vmem, size = 0x1000, scoped, tag = 'input window, operand 1, single buffered']
    #allocation6 [shape = 's32[1]{0}', space=sflag, size = 0x4, scoped, tag = 'scoped memory for tpu_custom_call.1']
    #allocation7 [shape = 'u8[131072]{0}', space=vmem, size = 0x20000, scoped, tag = 'input window, operand 2, single buffered']
    #allocation8 [shape = 'u8[131072]{0}', space=vmem, size = 0x20000, scoped, tag = 'input window, operand 3, single buffered']
    #allocation9 [shape = 's32[1]{0}', space=sflag, size = 0x4, scoped, tag = 'scoped memory for tpu_custom_call.1']
    #allocation10 [shape = 'u8[4096]{0}', space=vmem, size = 0x1000, scoped, tag = 'output window, operand 0, single buffered']
    #allocation11 [shape = 'u8[4096]{0}', space=vmem, size = 0x1000, scoped, tag = 'output window, operand 1, single buffered']
    #allocation12 [shape = 's32[1]{0}', space=sflag, size = 0x4, scoped, tag = 'scoped memory for tpu_custom_call.1']
    %11 = vsyncpa [#allocation3], 0
    %12 = vsyncpa [#allocation6], 0
    %13 = vsyncpa [#allocation9], 0
    %14 = vsyncpa [#allocation4], 0
    %15 = vsyncpa [#allocation12], 0
    // Predicated region
    $region2: #{tpu_custom_call.1} parent=1 // pred_check
      _
    $region3: #{tpu_custom_call.1} parent=1 // pred_check_branch
      %17 = sbr.rel (0) target = $region5
    $region4: #{tpu_custom_call.1} parent=1 // pred_region
      %s19 = ssub.s32 1024, 1024
      %20 = vsyncadd [#allocation3], %s19
      %s21 = sshll.u32 [#allocation2], 4
      %s22 = int_to_ptr.vmem [resolvable:$true] %s21
      %27 = dma.hbm_to_vmem [thread:$0]  %s0, 1024, %s22, [#allocation3], 128, 128, 8
    $region5: #{tpu_custom_call.1} parent=1 // pred_fallthru
      _
    // Predicated region
    $region6: #{tpu_custom_call.1} parent=1 // pred_check
      _
    $region7: #{tpu_custom_call.1} parent=1 // pred_check_branch
      %29 = sbr.rel (0) target = $region9
    $region8: #{tpu_custom_call.1} parent=1 // pred_region
      %s31 = ssub.s32 128, 128
      %32 = vsyncadd [#allocation6], %s31
      %s34 = sshll.u32 [#allocation5], 4
      %s35 = int_to_ptr.vmem [resolvable:$true] %s34
      %37 = dma.hbm_to_vmem [thread:$0]  %s1, 128, %s35, [#allocation6]
    $region9: #{tpu_custom_call.1} parent=1 // pred_fallthru
      _
    // Predicated region
    $region10: #{tpu_custom_call.1} parent=1 // pred_check
      _
    $region11: #{tpu_custom_call.1} parent=1 // pred_check_branch
      %39 = sbr.rel (0) target = $region13
    $region12: #{tpu_custom_call.1} parent=1 // pred_region
      %s41 = ssub.s32 4096, 4096
      %42 = vsyncadd [#allocation6], %s41
      %s43 = sshll.u32 [#allocation7], 4
      %s44 = int_to_ptr.vmem [resolvable:$true] %s43
      %49 = dma.hbm_to_vmem [thread:$0]  %s2, 4096, %s44, [#allocation6], 128, 128, 8
    $region13: #{tpu_custom_call.1} parent=1 // pred_fallthru
      _
    // Predicated region
    $region14: #{tpu_custom_call.1} parent=1 // pred_check
      _
    $region15: #{tpu_custom_call.1} parent=1 // pred_check_branch
      %51 = sbr.rel (0) target = $region17
    $region16: #{tpu_custom_call.1} parent=1 // pred_region
      %s53 = ssub.s32 4096, 4096
      %54 = vsyncadd [#allocation9], %s53
      %s55 = sshll.u32 [#allocation8], 4
      %s56 = int_to_ptr.vmem [resolvable:$true] %s55
      %61 = dma.hbm_to_vmem [thread:$0]  %s3, 4096, %s56, [#allocation9], 128, 128, 8
    $region17: #{tpu_custom_call.1} parent=1 // pred_fallthru
      _
    // Predicated region
    $region18: #{tpu_custom_call.1} parent=1 // pred_check
      _
    $region19: #{tpu_custom_call.1} parent=1 // pred_check_branch
      %63 = sbr.rel (0) target = $region21
    $region20: #{tpu_custom_call.1} parent=1 // pred_region
      %64 = dma.done [#allocation3], 1024
    $region21: #{tpu_custom_call.1} parent=1 // pred_fallthru
      _
    // Predicated region
    $region22: #{tpu_custom_call.1} parent=1 // pred_check
      _
    $region23: #{tpu_custom_call.1} parent=1 // pred_check_branch
      %66 = sbr.rel (0) target = $region25
    $region24: #{tpu_custom_call.1} parent=1 // pred_region
      %67 = dma.done [#allocation6], 128
    $region25: #{tpu_custom_call.1} parent=1 // pred_fallthru
      _
    // Predicated region
    $region26: #{tpu_custom_call.1} parent=1 // pred_check
      _
    $region27: #{tpu_custom_call.1} parent=1 // pred_check_branch
      %69 = sbr.rel (0) target = $region29
    $region28: #{tpu_custom_call.1} parent=1 // pred_region
      %70 = dma.done [#allocation6], 4096
    $region29: #{tpu_custom_call.1} parent=1 // pred_fallthru
      _
    // Predicated region
    $region30: #{tpu_custom_call.1} parent=1 // pred_check
      _
    $region31: #{tpu_custom_call.1} parent=1 // pred_check_branch
      %72 = sbr.rel (0) target = $region33
    $region32: #{tpu_custom_call.1} parent=1 // pred_region
      %73 = dma.done [#allocation9], 4096
    $region33: #{tpu_custom_call.1} parent=1 // pred_fallthru
      _
    %v74 = vld [vmem:[#allocation5] sm:$0xff]
    %v75 = vld [vmem:[#allocation2] sm:$0xff]
    %v76 = vld [vmem:[#allocation7] sm:$0xff]
    %v77 = vld [vmem:[#allocation7 + $0x8] sm:$0xff]
    %v78 = vld [vmem:[#allocation7 + $0x10] sm:$0xff]
    %v79 = vld [vmem:[#allocation7 + $0x18] sm:$0xff]
    %v80 = vld [vmem:[#allocation7 + $0x20] sm:$0xff]
    %v81 = vld [vmem:[#allocation7 + $0x28] sm:$0xff]
    %v82 = vld [vmem:[#allocation7 + $0x30] sm:$0xff]
    %v83 = vld [vmem:[#allocation7 + $0x38] sm:$0xff]
    %v84 = vld [vmem:[#allocation7 + $0x40] sm:$0xff]
    %v85 = vld [vmem:[#allocation7 + $0x48] sm:$0xff]
    %v86 = vld [vmem:[#allocation7 + $0x50] sm:$0xff]
    %v87 = vld [vmem:[#allocation7 + $0x58] sm:$0xff]
    %v88 = vld [vmem:[#allocation7 + $0x60] sm:$0xff]
    %v89 = vld [vmem:[#allocation7 + $0x68] sm:$0xff]
    %v90 = vld [vmem:[#allocation7 + $0x70] sm:$0xff]
    %v91 = vld [vmem:[#allocation7 + $0x78] sm:$0xff]
    %v92 = vld [vmem:[#allocation7 + $0x80] sm:$0xff]
    %v93 = vld [vmem:[#allocation7 + $0x88] sm:$0xff]
    %v94 = vld [vmem:[#allocation7 + $0x90] sm:$0xff]
    %v95 = vld [vmem:[#allocation7 + $0x98] sm:$0xff]
    %v96 = vld [vmem:[#allocation7 + $0xa0] sm:$0xff]
    %v97 = vld [vmem:[#allocation7 + $0xa8] sm:$0xff]
    %v98 = vld [vmem:[#allocation7 + $0xb0] sm:$0xff]
    %v99 = vld [vmem:[#allocation7 + $0xb8] sm:$0xff]
    %v100 = vld [vmem:[#allocation7 + $0xc0] sm:$0xff]
    %v101 = vld [vmem:[#allocation7 + $0xc8] sm:$0xff]
    %v102 = vld [vmem:[#allocation7 + $0xd0] sm:$0xff]
    %v103 = vld [vmem:[#allocation7 + $0xd8] sm:$0xff]
    %v104 = vld [vmem:[#allocation7 + $0xe0] sm:$0xff]
    %v105 = vld [vmem:[#allocation7 + $0xe8] sm:$0xff]
    %v106 = vld [vmem:[#allocation7 + $0xf0] sm:$0xff]
    %v107 = vld [vmem:[#allocation7 + $0xf8] sm:$0xff]
    %108 = vmatprep.subr.mxu0 0.0
    %109 = vmatpush1.msra.mxu0 %v76
    %110 = vmatprep.subr.mxu0 0.0
    %111 = vmatpush1.msra.mxu0 %v77
    %112 = vmatprep.subr.mxu0 0.0
    %113 = vmatpush1.msra.mxu0 %v78
    %114 = vmatprep.subr.mxu0 0.0
    %115 = vmatpush1.msra.mxu0 %v79
    %116 = vmatprep.subr.mxu0 0.0
    %117 = vmatpush1.msra.mxu0 %v80
    %118 = vmatprep.subr.mxu0 0.0
    %119 = vmatpush1.msra.mxu0 %v81
    %120 = vmatprep.subr.mxu0 0.0
    %121 = vmatpush1.msra.mxu0 %v82
    %122 = vmatprep.subr.mxu0 0.0
    %123 = vmatpush1.msra.mxu0 %v83
    %124 = vmatprep.subr.mxu0 0.0
    %125 = vmatpush1.msra.mxu0 %v84
    %126 = vmatprep.subr.mxu0 0.0
    %127 = vmatpush1.msra.mxu0 %v85
    %128 = vmatprep.subr.mxu0 0.0
    %129 = vmatpush1.msra.mxu0 %v86
    %130 = vmatprep.subr.mxu0 0.0
    %131 = vmatpush1.msra.mxu0 %v87
    %132 = vmatprep.subr.mxu0 0.0
    %133 = vmatpush1.msra.mxu0 %v88
    %134 = vmatprep.subr.mxu0 0.0
    %135 = vmatpush1.msra.mxu0 %v89
    %136 = vmatprep.subr.mxu0 0.0
    %137 = vmatpush1.msra.mxu0 %v90
    %138 = vmatprep.subr.mxu0 0.0
    %139 = vmatpush1.msra.mxu0 %v91
    %140 = vmatprep.subr.mxu0 0.0
    %141 = vmatpush1.msra.mxu0 %v92
    %142 = vmatprep.subr.mxu0 0.0
    %143 = vmatpush1.msra.mxu0 %v93
    %144 = vmatprep.subr.mxu0 0.0
    %145 = vmatpush1.msra.mxu0 %v94
    %146 = vmatprep.subr.mxu0 0.0
    %147 = vmatpush1.msra.mxu0 %v95
    %148 = vmatprep.subr.mxu0 0.0
    %149 = vmatpush1.msra.mxu0 %v96
    %150 = vmatprep.subr.mxu0 0.0
    %151 = vmatpush1.msra.mxu0 %v97
    %152 = vmatprep.subr.mxu0 0.0
    %153 = vmatpush1.msra.mxu0 %v98
    %154 = vmatprep.subr.mxu0 0.0
    %155 = vmatpush1.msra.mxu0 %v99
    %156 = vmatprep.subr.mxu0 0.0
    %157 = vmatpush1.msra.mxu0 %v100
    %158 = vmatprep.subr.mxu0 0.0
    %159 = vmatpush1.msra.mxu0 %v101
    %160 = vmatprep.subr.mxu0 0.0
    %161 = vmatpush1.msra.mxu0 %v102
    %162 = vmatprep.subr.mxu0 0.0
    %163 = vmatpush1.msra.mxu0 %v103
    %164 = vmatprep.subr.mxu0 0.0
    %165 = vmatpush1.msra.mxu0 %v104
    %166 = vmatprep.subr.mxu0 0.0
    %167 = vmatpush1.msra.mxu0 %v105
    %168 = vmatprep.subr.mxu0 0.0
    %169 = vmatpush1.msra.mxu0 %v106
    %170 = vmatprep.subr.mxu0 0.0
    %171 = vmatpush1.msra.mxu0 %v107
    %172 = vmatprep.mubr.f32.mxu0 %v74
    %173 = vmatmul.mubr.f32.gmra.mrb[0].mxu0 %v75
    %v174 = vpop.f32.mrb[0].mxu0
    %v175 = vadd.f32 0.0, %v174
    %v176 = vpop.f32.mrb[0].mxu0
    %177 = vdwg.mxu0
    %s178 = scalar_lea.vmem [#allocation2], 8
    %v179 = vld [vmem:[%s178] sm:$0xff]
    %180 = vmatprep.subr.mxu0 0.0
    %181 = vmatpush1.msra.mxu0 %v76
    %182 = vmatprep.subr.mxu0 0.0
    %183 = vmatpush1.msra.mxu0 %v77
    %184 = vmatprep.subr.mxu0 0.0
    %185 = vmatpush1.msra.mxu0 %v78
    %186 = vmatprep.subr.mxu0 0.0
    %187 = vmatpush1.msra.mxu0 %v79
    %188 = vmatprep.subr.mxu0 0.0
    %189 = vmatpush1.msra.mxu0 %v80
    %190 = vmatprep.subr.mxu0 0.0
    %191 = vmatpush1.msra.mxu0 %v81
    %192 = vmatprep.subr.mxu0 0.0
    %193 = vmatpush1.msra.mxu0 %v82
    %194 = vmatprep.subr.mxu0 0.0
    %195 = vmatpush1.msra.mxu0 %v83
    %196 = vmatprep.subr.mxu0 0.0
    %197 = vmatpush1.msra.mxu0 %v84
    %198 = vmatprep.subr.mxu0 0.0
    %199 = vmatpush1.msra.mxu0 %v85
    %200 = vmatprep.subr.mxu0 0.0
    %201 = vmatpush1.msra.mxu0 %v86
    %202 = vmatprep.subr.mxu0 0.0
    %203 = vmatpush1.msra.mxu0 %v87
    %204 = vmatprep.subr.mxu0 0.0
    %205 = vmatpush1.msra.mxu0 %v88
    %206 = vmatprep.subr.mxu0 0.0
    %207 = vmatpush1.msra.mxu0 %v89
    %208 = vmatprep.subr.mxu0 0.0
    %209 = vmatpush1.msra.mxu0 %v90
    %210 = vmatprep.subr.mxu0 0.0
    %211 = vmatpush1.msra.mxu0 %v91
    %212 = vmatprep.subr.mxu0 0.0
    %213 = vmatpush1.msra.mxu0 %v92
    %214 = vmatprep.subr.mxu0 0.0
    %215 = vmatpush1.msra.mxu0 %v93
    %216 = vmatprep.subr.mxu0 0.0
    %217 = vmatpush1.msra.mxu0 %v94
    %218 = vmatprep.subr.mxu0 0.0
    %219 = vmatpush1.msra.mxu0 %v95
    %220 = vmatprep.subr.mxu0 0.0
    %221 = vmatpush1.msra.mxu0 %v96
    %222 = vmatprep.subr.mxu0 0.0
    %223 = vmatpush1.msra.mxu0 %v97
    %224 = vmatprep.subr.mxu0 0.0
    %225 = vmatpush1.msra.mxu0 %v98
    %226 = vmatprep.subr.mxu0 0.0
    %227 = vmatpush1.msra.mxu0 %v99
    %228 = vmatprep.subr.mxu0 0.0
    %229 = vmatpush1.msra.mxu0 %v100
    %230 = vmatprep.subr.mxu0 0.0
    %231 = vmatpush1.msra.mxu0 %v101
    %232 = vmatprep.subr.mxu0 0.0
    %233 = vmatpush1.msra.mxu0 %v102
    %234 = vmatprep.subr.mxu0 0.0
    %235 = vmatpush1.msra.mxu0 %v103
    %236 = vmatprep.subr.mxu0 0.0
    %237 = vmatpush1.msra.mxu0 %v104
    %238 = vmatprep.subr.mxu0 0.0
    %239 = vmatpush1.msra.mxu0 %v105
    %240 = vmatprep.subr.mxu0 0.0
    %241 = vmatpush1.msra.mxu0 %v106
    %242 = vmatprep.subr.mxu0 0.0
    %243 = vmatpush1.msra.mxu0 %v107
    %244 = vmatprep.mubr.f32.mxu0 %v175
    %245 = vmatmul.mubr.f32.gmra.mrb[0].mxu0 %v179
    %v246 = vpop.f32.mrb[0].mxu0
    %v247 = vadd.f32 0.0, %v246
    %v248 = vpop.f32.mrb[0].mxu0
    %249 = vdwg.mxu0
    %s250 = scalar_lea.vmem [#allocation2], 16
    %v251 = vld [vmem:[%s250] sm:$0xff]
    %252 = vmatprep.subr.mxu0 0.0
    %253 = vmatpush1.msra.mxu0 %v76
    %254 = vmatprep.subr.mxu0 0.0
    %255 = vmatpush1.msra.mxu0 %v77
    %256 = vmatprep.subr.mxu0 0.0
    %257 = vmatpush1.msra.mxu0 %v78
    %258 = vmatprep.subr.mxu0 0.0
    %259 = vmatpush1.msra.mxu0 %v79
    %260 = vmatprep.subr.mxu0 0.0
    %261 = vmatpush1.msra.mxu0 %v80
    %262 = vmatprep.subr.mxu0 0.0
    %263 = vmatpush1.msra.mxu0 %v81
    %264 = vmatprep.subr.mxu0 0.0
    %265 = vmatpush1.msra.mxu0 %v82
    %266 = vmatprep.subr.mxu0 0.0
    %267 = vmatpush1.msra.mxu0 %v83
    %268 = vmatprep.subr.mxu0 0.0
    %269 = vmatpush1.msra.mxu0 %v84
    %270 = vmatprep.subr.mxu0 0.0
    %271 = vmatpush1.msra.mxu0 %v85
    %272 = vmatprep.subr.mxu0 0.0
    %273 = vmatpush1.msra.mxu0 %v86
    %274 = vmatprep.subr.mxu0 0.0
    %275 = vmatpush1.msra.mxu0 %v87
    %276 = vmatprep.subr.mxu0 0.0
    %277 = vmatpush1.msra.mxu0 %v88
    %278 = vmatprep.subr.mxu0 0.0
    %279 = vmatpush1.msra.mxu0 %v89
    %280 = vmatprep.subr.mxu0 0.0
    %281 = vmatpush1.msra.mxu0 %v90
    %282 = vmatprep.subr.mxu0 0.0
    %283 = vmatpush1.msra.mxu0 %v91
    %284 = vmatprep.subr.mxu0 0.0
    %285 = vmatpush1.msra.mxu0 %v92
    %286 = vmatprep.subr.mxu0 0.0
    %287 = vmatpush1.msra.mxu0 %v93
    %288 = vmatprep.subr.mxu0 0.0
    %289 = vmatpush1.msra.mxu0 %v94
    %290 = vmatprep.subr.mxu0 0.0
    %291 = vmatpush1.msra.mxu0 %v95
    %292 = vmatprep.subr.mxu0 0.0
    %293 = vmatpush1.msra.mxu0 %v96
    %294 = vmatprep.subr.mxu0 0.0
    %295 = vmatpush1.msra.mxu0 %v97
    %296 = vmatprep.subr.mxu0 0.0
    %297 = vmatpush1.msra.mxu0 %v98
    %298 = vmatprep.subr.mxu0 0.0
    %299 = vmatpush1.msra.mxu0 %v99
    %300 = vmatprep.subr.mxu0 0.0
    %301 = vmatpush1.msra.mxu0 %v100
    %302 = vmatprep.subr.mxu0 0.0
    %303 = vmatpush1.msra.mxu0 %v101
    %304 = vmatprep.subr.mxu0 0.0
    %305 = vmatpush1.msra.mxu0 %v102
    %306 = vmatprep.subr.mxu0 0.0
    %307 = vmatpush1.msra.mxu0 %v103
    %308 = vmatprep.subr.mxu0 0.0
    %309 = vmatpush1.msra.mxu0 %v104
    %310 = vmatprep.subr.mxu0 0.0
    %311 = vmatpush1.msra.mxu0 %v105
    %312 = vmatprep.subr.mxu0 0.0
    %313 = vmatpush1.msra.mxu0 %v106
    %314 = vmatprep.subr.mxu0 0.0
    %315 = vmatpush1.msra.mxu0 %v107
    %316 = vmatprep.mubr.f32.mxu0 %v247
    %317 = vmatmul.mubr.f32.gmra.mrb[0].mxu0 %v251
    %v318 = vpop.f32.mrb[0].mxu0
    %v319 = vadd.f32 0.0, %v318
    %v320 = vpop.f32.mrb[0].mxu0
    %321 = vdwg.mxu0
    %s322 = scalar_lea.vmem [#allocation2], 24
    %v323 = vld [vmem:[%s322] sm:$0xff]
    %324 = vmatprep.subr.mxu0 0.0
    %325 = vmatpush1.msra.mxu0 %v76
    %326 = vmatprep.subr.mxu0 0.0
    %327 = vmatpush1.msra.mxu0 %v77
    %328 = vmatprep.subr.mxu0 0.0
    %329 = vmatpush1.msra.mxu0 %v78
    %330 = vmatprep.subr.mxu0 0.0
    %331 = vmatpush1.msra.mxu0 %v79
    %332 = vmatprep.subr.mxu0 0.0
    %333 = vmatpush1.msra.mxu0 %v80
    %334 = vmatprep.subr.mxu0 0.0
    %335 = vmatpush1.msra.mxu0 %v81
    %336 = vmatprep.subr.mxu0 0.0
    %337 = vmatpush1.msra.mxu0 %v82
    %338 = vmatprep.subr.mxu0 0.0
    %339 = vmatpush1.msra.mxu0 %v83
    %340 = vmatprep.subr.mxu0 0.0
    %341 = vmatpush1.msra.mxu0 %v84
    %342 = vmatprep.subr.mxu0 0.0
    %343 = vmatpush1.msra.mxu0 %v85
    %344 = vmatprep.subr.mxu0 0.0
    %345 = vmatpush1.msra.mxu0 %v86
    %346 = vmatprep.subr.mxu0 0.0
    %347 = vmatpush1.msra.mxu0 %v87
    %348 = vmatprep.subr.mxu0 0.0
    %349 = vmatpush1.msra.mxu0 %v88
    %350 = vmatprep.subr.mxu0 0.0
    %351 = vmatpush1.msra.mxu0 %v89
    %352 = vmatprep.subr.mxu0 0.0
    %353 = vmatpush1.msra.mxu0 %v90
    %354 = vmatprep.subr.mxu0 0.0
    %355 = vmatpush1.msra.mxu0 %v91
    %356 = vmatprep.subr.mxu0 0.0
    %357 = vmatpush1.msra.mxu0 %v92
    %358 = vmatprep.subr.mxu0 0.0
    %359 = vmatpush1.msra.mxu0 %v93
    %360 = vmatprep.subr.mxu0 0.0
    %361 = vmatpush1.msra.mxu0 %v94
    %362 = vmatprep.subr.mxu0 0.0
    %363 = vmatpush1.msra.mxu0 %v95
    %364 = vmatprep.subr.mxu0 0.0
    %365 = vmatpush1.msra.mxu0 %v96
    %366 = vmatprep.subr.mxu0 0.0
    %367 = vmatpush1.msra.mxu0 %v97
    %368 = vmatprep.subr.mxu0 0.0
    %369 = vmatpush1.msra.mxu0 %v98
    %370 = vmatprep.subr.mxu0 0.0
    %371 = vmatpush1.msra.mxu0 %v99
    %372 = vmatprep.subr.mxu0 0.0
    %373 = vmatpush1.msra.mxu0 %v100
    %374 = vmatprep.subr.mxu0 0.0
    %375 = vmatpush1.msra.mxu0 %v101
    %376 = vmatprep.subr.mxu0 0.0
    %377 = vmatpush1.msra.mxu0 %v102
    %378 = vmatprep.subr.mxu0 0.0
    %379 = vmatpush1.msra.mxu0 %v103
    %380 = vmatprep.subr.mxu0 0.0
    %381 = vmatpush1.msra.mxu0 %v104
    %382 = vmatprep.subr.mxu0 0.0
    %383 = vmatpush1.msra.mxu0 %v105
    %384 = vmatprep.subr.mxu0 0.0
    %385 = vmatpush1.msra.mxu0 %v106
    %386 = vmatprep.subr.mxu0 0.0
    %387 = vmatpush1.msra.mxu0 %v107
    %388 = vmatprep.mubr.f32.mxu0 %v319
    %389 = vmatmul.mubr.f32.gmra.mrb[0].mxu0 %v323
    %v390 = vpop.f32.mrb[0].mxu0
    %v391 = vadd.f32 0.0, %v390
    %v392 = vpop.f32.mrb[0].mxu0
    %393 = vdwg.mxu0
    %s394 = scalar_lea.vmem [#allocation2], 32
    %v395 = vld [vmem:[%s394] sm:$0xff]
    %396 = vmatprep.subr.mxu0 0.0
    %397 = vmatpush1.msra.mxu0 %v76
    %398 = vmatprep.subr.mxu0 0.0
    %399 = vmatpush1.msra.mxu0 %v77
    %400 = vmatprep.subr.mxu0 0.0
    %401 = vmatpush1.msra.mxu0 %v78
    %402 = vmatprep.subr.mxu0 0.0
    %403 = vmatpush1.msra.mxu0 %v79
    %404 = vmatprep.subr.mxu0 0.0
    %405 = vmatpush1.msra.mxu0 %v80
    %406 = vmatprep.subr.mxu0 0.0
    %407 = vmatpush1.msra.mxu0 %v81
    %408 = vmatprep.subr.mxu0 0.0
    %409 = vmatpush1.msra.mxu0 %v82
    %410 = vmatprep.subr.mxu0 0.0
    %411 = vmatpush1.msra.mxu0 %v83
    %412 = vmatprep.subr.mxu0 0.0
    %413 = vmatpush1.msra.mxu0 %v84
    %414 = vmatprep.subr.mxu0 0.0
    %415 = vmatpush1.msra.mxu0 %v85
    %416 = vmatprep.subr.mxu0 0.0
    %417 = vmatpush1.msra.mxu0 %v86
    %418 = vmatprep.subr.mxu0 0.0
    %419 = vmatpush1.msra.mxu0 %v87
    %420 = vmatprep.subr.mxu0 0.0
    %421 = vmatpush1.msra.mxu0 %v88
    %422 = vmatprep.subr.mxu0 0.0
    %423 = vmatpush1.msra.mxu0 %v89
    %424 = vmatprep.subr.mxu0 0.0
    %425 = vmatpush1.msra.mxu0 %v90
    %426 = vmatprep.subr.mxu0 0.0
    %427 = vmatpush1.msra.mxu0 %v91
    %428 = vmatprep.subr.mxu0 0.0
    %429 = vmatpush1.msra.mxu0 %v92
    %430 = vmatprep.subr.mxu0 0.0
    %431 = vmatpush1.msra.mxu0 %v93
    %432 = vmatprep.subr.mxu0 0.0
    %433 = vmatpush1.msra.mxu0 %v94
    %434 = vmatprep.subr.mxu0 0.0
    %435 = vmatpush1.msra.mxu0 %v95
    %436 = vmatprep.subr.mxu0 0.0
    %437 = vmatpush1.msra.mxu0 %v96
    %438 = vmatprep.subr.mxu0 0.0
    %439 = vmatpush1.msra.mxu0 %v97
    %440 = vmatprep.subr.mxu0 0.0
    %441 = vmatpush1.msra.mxu0 %v98
    %442 = vmatprep.subr.mxu0 0.0
    %443 = vmatpush1.msra.mxu0 %v99
    %444 = vmatprep.subr.mxu0 0.0
    %445 = vmatpush1.msra.mxu0 %v100
    %446 = vmatprep.subr.mxu0 0.0
    %447 = vmatpush1.msra.mxu0 %v101
    %448 = vmatprep.subr.mxu0 0.0
    %449 = vmatpush1.msra.mxu0 %v102
    %450 = vmatprep.subr.mxu0 0.0
    %451 = vmatpush1.msra.mxu0 %v103
    %452 = vmatprep.subr.mxu0 0.0
    %453 = vmatpush1.msra.mxu0 %v104
    %454 = vmatprep.subr.mxu0 0.0
    %455 = vmatpush1.msra.mxu0 %v105
    %456 = vmatprep.subr.mxu0 0.0
    %457 = vmatpush1.msra.mxu0 %v106
    %458 = vmatprep.subr.mxu0 0.0
    %459 = vmatpush1.msra.mxu0 %v107
    %460 = vmatprep.mubr.f32.mxu0 %v391
    %461 = vmatmul.mubr.f32.gmra.mrb[0].mxu0 %v395
    %v462 = vpop.f32.mrb[0].mxu0
    %v463 = vadd.f32 0.0, %v462
    %v464 = vpop.f32.mrb[0].mxu0
    %465 = vdwg.mxu0
    %s466 = scalar_lea.vmem [#allocation2], 40
    %v467 = vld [vmem:[%s466] sm:$0xff]
    %468 = vmatprep.subr.mxu0 0.0
    %469 = vmatpush1.msra.mxu0 %v76
    %470 = vmatprep.subr.mxu0 0.0
    %471 = vmatpush1.msra.mxu0 %v77
    %472 = vmatprep.subr.mxu0 0.0
    %473 = vmatpush1.msra.mxu0 %v78
    %474 = vmatprep.subr.mxu0 0.0
    %475 = vmatpush1.msra.mxu0 %v79
    %476 = vmatprep.subr.mxu0 0.0
    %477 = vmatpush1.msra.mxu0 %v80
    %478 = vmatprep.subr.mxu0 0.0
    %479 = vmatpush1.msra.mxu0 %v81
    %480 = vmatprep.subr.mxu0 0.0
    %481 = vmatpush1.msra.mxu0 %v82
    %482 = vmatprep.subr.mxu0 0.0
    %483 = vmatpush1.msra.mxu0 %v83
    %484 = vmatprep.subr.mxu0 0.0
    %485 = vmatpush1.msra.mxu0 %v84
    %486 = vmatprep.subr.mxu0 0.0
    %487 = vmatpush1.msra.mxu0 %v85
    %488 = vmatprep.subr.mxu0 0.0
    %489 = vmatpush1.msra.mxu0 %v86
    %490 = vmatprep.subr.mxu0 0.0
    %491 = vmatpush1.msra.mxu0 %v87
    %492 = vmatprep.subr.mxu0 0.0
    %493 = vmatpush1.msra.mxu0 %v88
    %494 = vmatprep.subr.mxu0 0.0
    %495 = vmatpush1.msra.mxu0 %v89
    %496 = vmatprep.subr.mxu0 0.0
    %497 = vmatpush1.msra.mxu0 %v90
    %498 = vmatprep.subr.mxu0 0.0
    %499 = vmatpush1.msra.mxu0 %v91
    %500 = vmatprep.subr.mxu0 0.0
    %501 = vmatpush1.msra.mxu0 %v92
    %502 = vmatprep.subr.mxu0 0.0
    %503 = vmatpush1.msra.mxu0 %v93
    %504 = vmatprep.subr.mxu0 0.0
    %505 = vmatpush1.msra.mxu0 %v94
    %506 = vmatprep.subr.mxu0 0.0
    %507 = vmatpush1.msra.mxu0 %v95
    %508 = vmatprep.subr.mxu0 0.0
    %509 = vmatpush1.msra.mxu0 %v96
    %510 = vmatprep.subr.mxu0 0.0
    %511 = vmatpush1.msra.mxu0 %v97
    %512 = vmatprep.subr.mxu0 0.0
    %513 = vmatpush1.msra.mxu0 %v98
    %514 = vmatprep.subr.mxu0 0.0
    %515 = vmatpush1.msra.mxu0 %v99
    %516 = vmatprep.subr.mxu0 0.0
    %517 = vmatpush1.msra.mxu0 %v100
    %518 = vmatprep.subr.mxu0 0.0
    %519 = vmatpush1.msra.mxu0 %v101
    %520 = vmatprep.subr.mxu0 0.0
    %521 = vmatpush1.msra.mxu0 %v102
    %522 = vmatprep.subr.mxu0 0.0
    %523 = vmatpush1.msra.mxu0 %v103
    %524 = vmatprep.subr.mxu0 0.0
    %525 = vmatpush1.msra.mxu0 %v104
    %526 = vmatprep.subr.mxu0 0.0
    %527 = vmatpush1.msra.mxu0 %v105
    %528 = vmatprep.subr.mxu0 0.0
    %529 = vmatpush1.msra.mxu0 %v106
    %530 = vmatprep.subr.mxu0 0.0
    %531 = vmatpush1.msra.mxu0 %v107
    %532 = vmatprep.mubr.f32.mxu0 %v463
    %533 = vmatmul.mubr.f32.gmra.mrb[0].mxu0 %v467
    %v534 = vpop.f32.mrb[0].mxu0
    %v535 = vadd.f32 0.0, %v534
    %v536 = vpop.f32.mrb[0].mxu0
    %537 = vdwg.mxu0
    %s538 = scalar_lea.vmem [#allocation2], 48
    %v539 = vld [vmem:[%s538] sm:$0xff]
    %540 = vmatprep.subr.mxu0 0.0
    %541 = vmatpush1.msra.mxu0 %v76
    %542 = vmatprep.subr.mxu0 0.0
    %543 = vmatpush1.msra.mxu0 %v77
    %544 = vmatprep.subr.mxu0 0.0
    %545 = vmatpush1.msra.mxu0 %v78
    %546 = vmatprep.subr.mxu0 0.0
    %547 = vmatpush1.msra.mxu0 %v79
    %548 = vmatprep.subr.mxu0 0.0
    %549 = vmatpush1.msra.mxu0 %v80
    %550 = vmatprep.subr.mxu0 0.0
    %551 = vmatpush1.msra.mxu0 %v81
    %552 = vmatprep.subr.mxu0 0.0
    %553 = vmatpush1.msra.mxu0 %v82
    %554 = vmatprep.subr.mxu0 0.0
    %555 = vmatpush1.msra.mxu0 %v83
    %556 = vmatprep.subr.mxu0 0.0
    %557 = vmatpush1.msra.mxu0 %v84
    %558 = vmatprep.subr.mxu0 0.0
    %559 = vmatpush1.msra.mxu0 %v85
    %560 = vmatprep.subr.mxu0 0.0
    %561 = vmatpush1.msra.mxu0 %v86
    %562 = vmatprep.subr.mxu0 0.0
    %563 = vmatpush1.msra.mxu0 %v87
    %564 = vmatprep.subr.mxu0 0.0
    %565 = vmatpush1.msra.mxu0 %v88
    %566 = vmatprep.subr.mxu0 0.0
    %567 = vmatpush1.msra.mxu0 %v89
    %568 = vmatprep.subr.mxu0 0.0
    %569 = vmatpush1.msra.mxu0 %v90
    %570 = vmatprep.subr.mxu0 0.0
    %571 = vmatpush1.msra.mxu0 %v91
    %572 = vmatprep.subr.mxu0 0.0
    %573 = vmatpush1.msra.mxu0 %v92
    %574 = vmatprep.subr.mxu0 0.0
    %575 = vmatpush1.msra.mxu0 %v93
    %576 = vmatprep.subr.mxu0 0.0
    %577 = vmatpush1.msra.mxu0 %v94
    %578 = vmatprep.subr.mxu0 0.0
    %579 = vmatpush1.msra.mxu0 %v95
    %580 = vmatprep.subr.mxu0 0.0
    %581 = vmatpush1.msra.mxu0 %v96
    %582 = vmatprep.subr.mxu0 0.0
    %583 = vmatpush1.msra.mxu0 %v97
    %584 = vmatprep.subr.mxu0 0.0
    %585 = vmatpush1.msra.mxu0 %v98
    %586 = vmatprep.subr.mxu0 0.0
    %587 = vmatpush1.msra.mxu0 %v99
    %588 = vmatprep.subr.mxu0 0.0
    %589 = vmatpush1.msra.mxu0 %v100
    %590 = vmatprep.subr.mxu0 0.0
    %591 = vmatpush1.msra.mxu0 %v101
    %592 = vmatprep.subr.mxu0 0.0
    %593 = vmatpush1.msra.mxu0 %v102
    %594 = vmatprep.subr.mxu0 0.0
    %595 = vmatpush1.msra.mxu0 %v103
    %596 = vmatprep.subr.mxu0 0.0
    %597 = vmatpush1.msra.mxu0 %v104
    %598 = vmatprep.subr.mxu0 0.0
    %599 = vmatpush1.msra.mxu0 %v105
    %600 = vmatprep.subr.mxu0 0.0
    %601 = vmatpush1.msra.mxu0 %v106
    %602 = vmatprep.subr.mxu0 0.0
    %603 = vmatpush1.msra.mxu0 %v107
    %604 = vmatprep.mubr.f32.mxu0 %v535
    %605 = vmatmul.mubr.f32.gmra.mrb[0].mxu0 %v539
    %v606 = vpop.f32.mrb[0].mxu0
    %v607 = vadd.f32 0.0, %v606
    %v608 = vpop.f32.mrb[0].mxu0
    %609 = vdwg.mxu0
    %s610 = scalar_lea.vmem [#allocation2], 56
    %v611 = vld [vmem:[%s610] sm:$0xff]
    %612 = vmatprep.subr.mxu0 0.0
    %613 = vmatpush1.msra.mxu0 %v76
    %614 = vmatprep.subr.mxu0 0.0
    %615 = vmatpush1.msra.mxu0 %v77
    %616 = vmatprep.subr.mxu0 0.0
    %617 = vmatpush1.msra.mxu0 %v78
    %618 = vmatprep.subr.mxu0 0.0
    %619 = vmatpush1.msra.mxu0 %v79
    %620 = vmatprep.subr.mxu0 0.0
    %621 = vmatpush1.msra.mxu0 %v80
    %622 = vmatprep.subr.mxu0 0.0
    %623 = vmatpush1.msra.mxu0 %v81
    %624 = vmatprep.subr.mxu0 0.0
    %625 = vmatpush1.msra.mxu0 %v82
    %626 = vmatprep.subr.mxu0 0.0
    %627 = vmatpush1.msra.mxu0 %v83
    %628 = vmatprep.subr.mxu0 0.0
    %629 = vmatpush1.msra.mxu0 %v84
    %630 = vmatprep.subr.mxu0 0.0
    %631 = vmatpush1.msra.mxu0 %v85
    %632 = vmatprep.subr.mxu0 0.0
    %633 = vmatpush1.msra.mxu0 %v86
    %634 = vmatprep.subr.mxu0 0.0
    %635 = vmatpush1.msra.mxu0 %v87
    %636 = vmatprep.subr.mxu0 0.0
    %637 = vmatpush1.msra.mxu0 %v88
    %638 = vmatprep.subr.mxu0 0.0
    %639 = vmatpush1.msra.mxu0 %v89
    %640 = vmatprep.subr.mxu0 0.0
    %641 = vmatpush1.msra.mxu0 %v90
    %642 = vmatprep.subr.mxu0 0.0
    %643 = vmatpush1.msra.mxu0 %v91
    %644 = vmatprep.subr.mxu0 0.0
    %645 = vmatpush1.msra.mxu0 %v92
    %646 = vmatprep.subr.mxu0 0.0
    %647 = vmatpush1.msra.mxu0 %v93
    %648 = vmatprep.subr.mxu0 0.0
    %649 = vmatpush1.msra.mxu0 %v94
    %650 = vmatprep.subr.mxu0 0.0
    %651 = vmatpush1.msra.mxu0 %v95
    %652 = vmatprep.subr.mxu0 0.0
    %653 = vmatpush1.msra.mxu0 %v96
    %654 = vmatprep.subr.mxu0 0.0
    %655 = vmatpush1.msra.mxu0 %v97
    %656 = vmatprep.subr.mxu0 0.0
    %657 = vmatpush1.msra.mxu0 %v98
    %658 = vmatprep.subr.mxu0 0.0
    %659 = vmatpush1.msra.mxu0 %v99
    %660 = vmatprep.subr.mxu0 0.0
    %661 = vmatpush1.msra.mxu0 %v100
    %662 = vmatprep.subr.mxu0 0.0
    %663 = vmatpush1.msra.mxu0 %v101
    %664 = vmatprep.subr.mxu0 0.0
    %665 = vmatpush1.msra.mxu0 %v102
    %666 = vmatprep.subr.mxu0 0.0
    %667 = vmatpush1.msra.mxu0 %v103
    %668 = vmatprep.subr.mxu0 0.0
    %669 = vmatpush1.msra.mxu0 %v104
    %670 = vmatprep.subr.mxu0 0.0
    %671 = vmatpush1.msra.mxu0 %v105
    %672 = vmatprep.subr.mxu0 0.0
    %673 = vmatpush1.msra.mxu0 %v106
    %674 = vmatprep.subr.mxu0 0.0
    %675 = vmatpush1.msra.mxu0 %v107
    %676 = vmatprep.mubr.f32.mxu0 %v607
    %677 = vmatmul.mubr.f32.gmra.mrb[0].mxu0 %v611
    %v678 = vpop.f32.mrb[0].mxu0
    %v679 = vadd.f32 0.0, %v678
    %v680 = vpop.f32.mrb[0].mxu0
    %681 = vdwg.mxu0
    %v682 = vld [vmem:[#allocation8] sm:$0xff]
    %v683 = vld [vmem:[#allocation8 + $0x8] sm:$0xff]
    %v684 = vld [vmem:[#allocation8 + $0x10] sm:$0xff]
    %v685 = vld [vmem:[#allocation8 + $0x18] sm:$0xff]
    %v686 = vld [vmem:[#allocation8 + $0x20] sm:$0xff]
    %v687 = vld [vmem:[#allocation8 + $0x28] sm:$0xff]
    %v688 = vld [vmem:[#allocation8 + $0x30] sm:$0xff]
    %v689 = vld [vmem:[#allocation8 + $0x38] sm:$0xff]
    %v690 = vld [vmem:[#allocation8 + $0x40] sm:$0xff]
    %v691 = vld [vmem:[#allocation8 + $0x48] sm:$0xff]
    %v692 = vld [vmem:[#allocation8 + $0x50] sm:$0xff]
    %v693 = vld [vmem:[#allocation8 + $0x58] sm:$0xff]
    %v694 = vld [vmem:[#allocation8 + $0x60] sm:$0xff]
    %v695 = vld [vmem:[#allocation8 + $0x68] sm:$0xff]
    %v696 = vld [vmem:[#allocation8 + $0x70] sm:$0xff]
    %v697 = vld [vmem:[#allocation8 + $0x78] sm:$0xff]
    %v698 = vld [vmem:[#allocation8 + $0x80] sm:$0xff]
    %v699 = vld [vmem:[#allocation8 + $0x88] sm:$0xff]
    %v700 = vld [vmem:[#allocation8 + $0x90] sm:$0xff]
    %v701 = vld [vmem:[#allocation8 + $0x98] sm:$0xff]
    %v702 = vld [vmem:[#allocation8 + $0xa0] sm:$0xff]
    %v703 = vld [vmem:[#allocation8 + $0xa8] sm:$0xff]
    %v704 = vld [vmem:[#allocation8 + $0xb0] sm:$0xff]
    %v705 = vld [vmem:[#allocation8 + $0xb8] sm:$0xff]
    %v706 = vld [vmem:[#allocation8 + $0xc0] sm:$0xff]
    %v707 = vld [vmem:[#allocation8 + $0xc8] sm:$0xff]
    %v708 = vld [vmem:[#allocation8 + $0xd0] sm:$0xff]
    %v709 = vld [vmem:[#allocation8 + $0xd8] sm:$0xff]
    %v710 = vld [vmem:[#allocation8 + $0xe0] sm:$0xff]
    %v711 = vld [vmem:[#allocation8 + $0xe8] sm:$0xff]
    %v712 = vld [vmem:[#allocation8 + $0xf0] sm:$0xff]
    %v713 = vld [vmem:[#allocation8 + $0xf8] sm:$0xff]
    %714 = vmatprep.subr.mxu0 0.0
    %715 = vmatpush1.msra.mxu0 %v682
    %716 = vmatprep.subr.mxu0 0.0
    %717 = vmatpush1.msra.mxu0 %v683
    %718 = vmatprep.subr.mxu0 0.0
    %719 = vmatpush1.msra.mxu0 %v684
    %720 = vmatprep.subr.mxu0 0.0
    %721 = vmatpush1.msra.mxu0 %v685
    %722 = vmatprep.subr.mxu0 0.0
    %723 = vmatpush1.msra.mxu0 %v686
    %724 = vmatprep.subr.mxu0 0.0
    %725 = vmatpush1.msra.mxu0 %v687
    %726 = vmatprep.subr.mxu0 0.0
    %727 = vmatpush1.msra.mxu0 %v688
    %728 = vmatprep.subr.mxu0 0.0
    %729 = vmatpush1.msra.mxu0 %v689
    %730 = vmatprep.subr.mxu0 0.0
    %731 = vmatpush1.msra.mxu0 %v690
    %732 = vmatprep.subr.mxu0 0.0
    %733 = vmatpush1.msra.mxu0 %v691
    %734 = vmatprep.subr.mxu0 0.0
    %735 = vmatpush1.msra.mxu0 %v692
    %736 = vmatprep.subr.mxu0 0.0
    %737 = vmatpush1.msra.mxu0 %v693
    %738 = vmatprep.subr.mxu0 0.0
    %739 = vmatpush1.msra.mxu0 %v694
    %740 = vmatprep.subr.mxu0 0.0
    %741 = vmatpush1.msra.mxu0 %v695
    %742 = vmatprep.subr.mxu0 0.0
    %743 = vmatpush1.msra.mxu0 %v696
    %744 = vmatprep.subr.mxu0 0.0
    %745 = vmatpush1.msra.mxu0 %v697
    %746 = vmatprep.subr.mxu0 0.0
    %747 = vmatpush1.msra.mxu0 %v698
    %748 = vmatprep.subr.mxu0 0.0
    %749 = vmatpush1.msra.mxu0 %v699
    %750 = vmatprep.subr.mxu0 0.0
    %751 = vmatpush1.msra.mxu0 %v700
    %752 = vmatprep.subr.mxu0 0.0
    %753 = vmatpush1.msra.mxu0 %v701
    %754 = vmatprep.subr.mxu0 0.0
    %755 = vmatpush1.msra.mxu0 %v702
    %756 = vmatprep.subr.mxu0 0.0
    %757 = vmatpush1.msra.mxu0 %v703
    %758 = vmatprep.subr.mxu0 0.0
    %759 = vmatpush1.msra.mxu0 %v704
    %760 = vmatprep.subr.mxu0 0.0
    %761 = vmatpush1.msra.mxu0 %v705
    %762 = vmatprep.subr.mxu0 0.0
    %763 = vmatpush1.msra.mxu0 %v706
    %764 = vmatprep.subr.mxu0 0.0
    %765 = vmatpush1.msra.mxu0 %v707
    %766 = vmatprep.subr.mxu0 0.0
    %767 = vmatpush1.msra.mxu0 %v708
    %768 = vmatprep.subr.mxu0 0.0
    %769 = vmatpush1.msra.mxu0 %v709
    %770 = vmatprep.subr.mxu0 0.0
    %771 = vmatpush1.msra.mxu0 %v710
    %772 = vmatprep.subr.mxu0 0.0
    %773 = vmatpush1.msra.mxu0 %v711
    %774 = vmatprep.subr.mxu0 0.0
    %775 = vmatpush1.msra.mxu0 %v712
    %776 = vmatprep.subr.mxu0 0.0
    %777 = vmatpush1.msra.mxu0 %v713
    %778 = vmatprep.mubr.f32.mxu0 %v607
    %779 = vmatmul.mubr.f32.gmra.mrb[0].mxu0 %v611
    %v780 = vpop.f32.mrb[0].mxu0
    %v781 = vadd.f32 0.0, %v780
    %v782 = vpop.f32.mrb[0].mxu0
    %783 = vdwg.mxu0
    %784 = vmax.xlane.f32.xlu0 %v781
    %v785 = vpop.xlane.xlu0 %784
    %v786 = vsub.f32 %v781, %v785
    %v787 = vmul.f32 %v786, 1.442695
    %v788 = vpow.pop %v787
    %789 = vadd.xlane.f32.xlu0 %v788
    %v790 = vpop.xlane.xlu0 %789
    %v791 = vlog2.pop %v790
    %v792 = vmul.f32 %v791, 0.6931472
    %v793 = vsub.f32 %v786, %v792
    %794 = vst [vmem:[#allocation10] sm:$0xff] %v793
    %795 = vst [vmem:[#allocation11] sm:$0xff] %v679
    // Predicated region
    $region34: #{tpu_custom_call.1} parent=1 // pred_check
      _
    $region35: #{tpu_custom_call.1} parent=1 // pred_check_branch
      %797 = sbr.rel (0) target = $region37
    $region36: #{tpu_custom_call.1} parent=1 // pred_region
      %s799 = ssub.s32 128, 128
      %800 = vsyncadd [#allocation4], %s799
      %s802 = sshll.u32 [#allocation10], 4
      %s803 = int_to_ptr.vmem [resolvable:$true] %s802
      %805 = dma.vmem_to_hbm [thread:$0]  %s803, 128, %s4, [#allocation4]
    $region37: #{tpu_custom_call.1} parent=1 // pred_fallthru
      _
    // Predicated region
    $region38: #{tpu_custom_call.1} parent=1 // pred_check
      _
    $region39: #{tpu_custom_call.1} parent=1 // pred_check_branch
      %807 = sbr.rel (0) target = $region41
    $region40: #{tpu_custom_call.1} parent=1 // pred_region
      %s809 = ssub.s32 128, 128
      %810 = vsyncadd [#allocation12], %s809
      %s812 = sshll.u32 [#allocation11], 4
      %s813 = int_to_ptr.vmem [resolvable:$true] %s812
      %815 = dma.vmem_to_hbm [thread:$0]  %s813, 128, %s5, [#allocation12]
    $region41: #{tpu_custom_call.1} parent=1 // pred_fallthru
      _
    // Predicated region
    $region42: #{tpu_custom_call.1} parent=1 // pred_check
      _
    $region43: #{tpu_custom_call.1} parent=1 // pred_check_branch
      %817 = sbr.rel (0) target = $region45
    $region44: #{tpu_custom_call.1} parent=1 // pred_region
      %818 = dma.done [#allocation4], 128
    $region45: #{tpu_custom_call.1} parent=1 // pred_fallthru
      _
    // Predicated region
    $region46: #{tpu_custom_call.1} parent=1 // pred_check
      _
    $region47: #{tpu_custom_call.1} parent=1 // pred_check_branch
      %820 = sbr.rel (0) target = $region49
    $region48: #{tpu_custom_call.1} parent=1 // pred_region
      %821 = dma.done [#allocation12], 128
    $region49: #{tpu_custom_call.1} parent=1 // pred_fallthru
      _
    %822 = vsyncpa [#allocation3], 1
    %823 = vsyncpa [#allocation6], 1
    %824 = vsyncpa [#allocation9], 1
    %825 = vsyncpa [#allocation4], 1
    %826 = vsyncpa [#allocation12], 1

</llo_original>
